<compile_context>
chip_gen: v7x
topology: tpu7x:2x2x1
jax: 0.10.0
libtpu: 0.0.40
codegen_flags: <defaults>
</compile_context>

<pallas_src>
import functools

import jax
import jax.numpy as jnp
from jax.experimental import pallas as pl
from jax.experimental.pallas import tpu as pltpu

_MIB = 1024 * 1024


# ----------------------------- kernels ---------------------------------------


def _mlp_kernel(x_ref,
                w1_ref, b1_ref,
                w2_ref, b2_ref,
                w3_ref, b3_ref,
                w4_ref, b4_ref,
                o_ref):
    """Fused 4-layer MLP on one batch tile; all weights resident in VMEM."""
    cdt = w1_ref.dtype  # MXU input dtype (bf16 by default); accumulation is f32

    h = jnp.dot(x_ref[...], w1_ref[...], preferred_element_type=jnp.float32) + b1_ref[...]
    h = jnp.maximum(h, 0.0).astype(cdt)

    h = jnp.dot(h, w2_ref[...], preferred_element_type=jnp.float32) + b2_ref[...]
    h = jnp.maximum(h, 0.0).astype(cdt)

    h = jnp.dot(h, w3_ref[...], preferred_element_type=jnp.float32) + b3_ref[...]
    h = jnp.maximum(h, 0.0).astype(cdt)

    out = jnp.dot(h, w4_ref[...], preferred_element_type=jnp.float32) + b4_ref[...]
    o_ref[...] = out.astype(o_ref.dtype)


def _linear_kernel(x_ref, w_ref, b_ref, o_ref, *, relu):
    """Single fused Linear(+ReLU) layer (fallback path when weights don't all fit)."""
    y = jnp.dot(x_ref[...], w_ref[...], preferred_element_type=jnp.float32) + b_ref[...]
    if relu:
        y = jnp.maximum(y, 0.0)
    o_ref[...] = y.astype(o_ref.dtype)


# ----------------------------- helpers ----------------------------------------


def _vmem_budget_bytes():
    """Usable per-TensorCore VMEM: physical capacity minus headroom for Mosaic scratch."""
    cap = 64 * _MIB  # conservative default (v7x per-TC physical VMEM)
    try:
        info = pltpu.get_tpu_info()
        c = getattr(info, "vmem_capacity_bytes", None)
        if c:
            cap = int(c)
    except Exception:
        pass
    # ~56 MiB on v7x (64 MiB physical), ~112 MiB on v5e/v6e (128 MiB physical).
    return max(cap - max(8 * _MIB, cap // 8), 32 * _MIB)


def _pick_tile_b(B, n_hid):
    """n_hid-aware batch tile; multiples of 256 (also a multiple of v5e's 128 MXU)."""
    if B < 512:
        return B                          # one step, no partial-tile waste
    if n_hid <= 512:
        cap = 2048                        # tiny weights / h-chain: big tiles -> HBM roofline
    elif n_hid <= 1024:
        cap = 1024
    else:
        cap = 256
    n_steps = max(2, pl.cdiv(B, cap))     # >=2 balanced steps for v7x's 2 TensorCores
    tb = ((pl.cdiv(B, n_steps) + 255) // 256) * 256
    return min(tb, cap)


def _resident_spec(shape, buffers):
    """Full-array block with a constant index_map (weights/biases stay in VMEM)."""
    idx = lambda i: tuple(0 for _ in shape)
    if buffers == 1:
        # Constant block index -> never re-fetched; one buffer is enough.
        return pl.BlockSpec(shape, idx, pipeline_mode=pl.Buffered(buffer_count=1))
    return pl.BlockSpec(shape, idx)


# ----------------------------- pallas_call wrappers ----------------------------


def _fused_forward(x, weights, biases, *, tb, out_dtype, vmem_cap, weight_buffers):
    w1, w2, w3, w4 = weights
    b1, b2, b3, b4 = biases
    B, in_f = x.shape
    n_hid = w1.shape[1]
    out_f = w4.shape[1]
    cdt_isz = w1.dtype.itemsize
    out_isz = jnp.dtype(out_dtype).itemsize

    w_elems = in_f * n_hid + 2 * n_hid * n_hid + n_hid * out_f
    b_elems = 3 * n_hid + out_f
    vmem_est = (2 * tb * in_f * x.dtype.itemsize        # double-buffered x tiles
                + 2 * tb * out_f * out_isz              # double-buffered out tiles
                + weight_buffers * (w_elems * cdt_isz + b_elems * 4)
                + 6 * tb * n_hid * 4)                   # live f32 h-chain / temporaries
    vmem_limit = int(min(max(2 * vmem_est, 32 * _MIB), vmem_cap))

    flops = 2 * B * (in_f * n_hid + 2 * n_hid * n_hid + n_hid * out_f)
    bytes_accessed = (B * in_f * x.dtype.itemsize + B * out_f * out_isz
                      + w_elems * cdt_isz + b_elems * 4)
    cost = pl.CostEstimate(flops=flops, transcendentals=0,
                           bytes_accessed=bytes_accessed)

    return pl.pallas_call(
        _mlp_kernel,
        out_shape=jax.ShapeDtypeStruct((B, out_f), out_dtype),
        grid_spec=pltpu.PrefetchScalarGridSpec(
            num_scalar_prefetch=0,
            grid=(pl.cdiv(B, tb),),
            in_specs=[
                pl.BlockSpec((tb, in_f), lambda i: (i, 0)),        # x batch tile
                _resident_spec((in_f, n_hid), weight_buffers),     # layer 1
                _resident_spec((1, n_hid), weight_buffers),
                _resident_spec((n_hid, n_hid), weight_buffers),    # layer 2
                _resident_spec((1, n_hid), weight_buffers),
                _resident_spec((n_hid, n_hid), weight_buffers),    # layer 3
                _resident_spec((1, n_hid), weight_buffers),
                _resident_spec((n_hid, out_f), weight_buffers),    # layer 4 (true width)
                _resident_spec((1, out_f), weight_buffers),
            ],
            out_specs=pl.BlockSpec((tb, out_f), lambda i: (i, 0)),
        ),
        compiler_params=pltpu.CompilerParams(
            dimension_semantics=("parallel",),
            vmem_limit_bytes=vmem_limit,
        ),
        cost_estimate=cost,
    )(x, w1, b1, w2, b2, w3, b3, w4, b4)


def _linear_forward(x, w, b, *, relu, tb, out_dtype, vmem_cap, weight_buffers):
    B, K = x.shape
    N = w.shape[1]
    out_isz = jnp.dtype(out_dtype).itemsize
    vmem_est = (2 * tb * K * x.dtype.itemsize + 2 * tb * N * out_isz
                + weight_buffers * (K * N * w.dtype.itemsize + N * 4)
                + 4 * tb * N * 4)
    vmem_limit = int(min(max(2 * vmem_est, 32 * _MIB), vmem_cap))
    cost = pl.CostEstimate(
        flops=2 * B * K * N, transcendentals=0,
        bytes_accessed=(B * K * x.dtype.itemsize + B * N * out_isz
                        + K * N * w.dtype.itemsize + N * 4))

    return pl.pallas_call(
        functools.partial(_linear_kernel, relu=relu),
        out_shape=jax.ShapeDtypeStruct((B, N), out_dtype),
        grid_spec=pltpu.PrefetchScalarGridSpec(
            num_scalar_prefetch=0,
            grid=(pl.cdiv(B, tb),),
            in_specs=[
                pl.BlockSpec((tb, K), lambda i: (i, 0)),
                _resident_spec((K, N), weight_buffers),
                _resident_spec((1, N), weight_buffers),
            ],
            out_specs=pl.BlockSpec((tb, N), lambda i: (i, 0)),
        ),
        compiler_params=pltpu.CompilerParams(
            dimension_semantics=("parallel",),
            vmem_limit_bytes=vmem_limit,
        ),
        cost_estimate=cost,
    )(x, w, b)


# ----------------------------- public entry point ------------------------------


def feedforward_dnn(x, params, *, tile_b=None, compute_dtype=jnp.bfloat16,
                    out_dtype=jnp.float32):
    """Forward pass of FeedForwardDNN.

    params = (w1, b1, w2, b2, w3, b3, w4, b4); weights are [in, out], biases [1, out].
    compute_dtype: MXU input dtype (bf16 default; pass jnp.float32 for exact f32
      fidelity with the PyTorch module).  Accumulation is always f32.
    out_dtype: dtype of the returned array (f32 default, matching torch; bf16 halves
      output write DMA when the consumer tolerates it).
    """
    w1, b1, w2, b2, w3, b3, w4, b4 = params
    B, in_f = x.shape
    n_hid = w1.shape[1]
    out_f = w4.shape[1]

    cdt = jnp.dtype(compute_dtype)
    weights = tuple(w.astype(cdt) for w in (w1, w2, w3, w4))
    biases = tuple(b.astype(jnp.float32) for b in (b1, b2, b3, b4))
    # Mirrors `x.float()` in the torch module followed by the cast the MXU needs
    # anyway; doing it in the wrapper halves the x HBM->VMEM DMA for bf16.
    x = x.astype(cdt)

    # Batch tile.
    if tile_b is not None:
        tb = max(1, min(int(tile_b), B))
        if tb != B:
            tb = max(8, (tb // 8) * 8)      # Mosaic (8,128) block-shape constraint
    else:
        tb = _pick_tile_b(B, n_hid)

    vmem_cap = _vmem_budget_bytes()
    cdt_isz = cdt.itemsize
    out_isz = jnp.dtype(out_dtype).itemsize
    w_elems = in_f * n_hid + 2 * n_hid * n_hid + n_hid * out_f

    def _fused_bytes(tb_, wbuf):
        return (2 * tb_ * in_f * cdt_isz
                + 2 * tb_ * out_f * out_isz
                + wbuf * (w_elems * cdt_isz + (3 * n_hid + out_f) * 4)
                + 6 * tb_ * n_hid * 4)

    def _run(weight_buffers):
        # Shrink the batch tile if the fused kernel would overflow the VMEM budget.
        tb_ = tb
        while _fused_bytes(tb_, weight_buffers) > vmem_cap and tb_ > 256:
            tb_ = max(256, ((tb_ // 2) // 8) * 8)
        if _fused_bytes(tb_, weight_buffers) <= vmem_cap:
            return _fused_forward(x, weights, biases, tb=tb_, out_dtype=out_dtype,
                                  vmem_cap=vmem_cap, weight_buffers=weight_buffers)
        # Weights can't all stay resident (e.g. large n_hid on v7x's 64 MiB VMEM):
        # run one fused Linear(+ReLU) pallas_call per layer instead.
        # TODO(synk): stream K/N weight tiles with pltpu.emit_pipeline when even a
        # single layer's weights exceed the VMEM budget.
        tb_layer = min(tb, 512)
        h = x
        for li, (w, b) in enumerate(zip(weights, biases)):
            last = li == 3
            h = _linear_forward(h, w, b, relu=not last, tb=tb_layer,
                                out_dtype=(out_dtype if last else cdt),
                                vmem_cap=vmem_cap, weight_buffers=weight_buffers)
        return h

    try:
        return _run(1)   # single-buffer the resident weights/biases (saves VMEM)
    except Exception:
        return _run(2)   # this jax version rejected pipeline_mode; default buffering


# ----------------------------- init & reference --------------------------------


def init_params(key, input_size, output_size, n_hid=128):
    """Deterministic PyTorch-style (Kaiming-uniform-ish) init; weights [in, out]."""
    dims = [(input_size, n_hid), (n_hid, n_hid), (n_hid, n_hid), (n_hid, output_size)]
    params = []
    for (fan_in, fan_out) in dims:
        key, kw, kb = jax.random.split(key, 3)
        bound = 1.0 / jnp.sqrt(float(fan_in))
        w = jax.random.uniform(kw, (fan_in, fan_out), jnp.float32, -bound, bound)
        b = jax.random.uniform(kb, (1, fan_out), jnp.float32, -bound, bound)
        params += [w, b]
    return tuple(params)


def _reference(x, params, compute_dtype):
    """Pure-JAX reference that mirrors the kernel's bf16-matmul / f32-accumulate path."""
    w1, b1, w2, b2, w3, b3, w4, b4 = params
    cdt = jnp.dtype(compute_dtype)
    h = x.astype(jnp.float32)
    for (w, b, relu) in ((w1, b1, True), (w2, b2, True), (w3, b3, True), (w4, b4, False)):
        h = jnp.dot(h.astype(cdt), w.astype(cdt),
                    preferred_element_type=jnp.float32) + b.astype(jnp.float32)
        if relu:
            h = jnp.maximum(h, 0.0)
    return h


if __name__ == "__main__":
    # Small shapes consistent with the module: x is [batch, input_size].
    batch, input_size, output_size, n_hid = 8, 16, 4, 128

    key = jax.random.PRNGKey(0)
    key, kx = jax.random.split(key)
    x = jax.random.normal(kx, (batch, input_size), jnp.float32)
    params = init_params(key, input_size, output_size, n_hid)

    out = jax.block_until_ready(feedforward_dnn(x, params))
    ref = _reference(x, params, jnp.bfloat16)
    assert out.shape == (batch, output_size)
    assert jnp.allclose(out, ref, atol=1e-3, rtol=1e-3)

    # Second run exercises the tiled-batch path (multiple grid steps + ragged tile).
    key, kx2 = jax.random.split(key)
    x2 = jax.random.normal(kx2, (576, input_size), jnp.float32)
    out2 = jax.block_until_ready(feedforward_dnn(x2, params))
    ref2 = _reference(x2, params, jnp.bfloat16)
    assert out2.shape == (576, output_size)
    assert jnp.allclose(out2, ref2, atol=1e-3, rtol=1e-3)

    print("KERNEL_OK")
</pallas_src>

<mosaic_0001>
module attributes {stable_mosaic.version = 11 : i64} {
  func.func @_mlp_kernel(%arg0: i32, %arg1: memref<8x16xbf16, #tpu.memory_space<vmem>>, %arg2: memref<16x128xbf16, #tpu.memory_space<vmem>>, %arg3: memref<1x128xf32, #tpu.memory_space<vmem>>, %arg4: memref<128x128xbf16, #tpu.memory_space<vmem>>, %arg5: memref<1x128xf32, #tpu.memory_space<vmem>>, %arg6: memref<128x128xbf16, #tpu.memory_space<vmem>>, %arg7: memref<1x128xf32, #tpu.memory_space<vmem>>, %arg8: memref<128x4xbf16, #tpu.memory_space<vmem>>, %arg9: memref<1x4xf32, #tpu.memory_space<vmem>>, %arg10: memref<8x4xf32, #tpu.memory_space<vmem>>) attributes {dimension_semantics = [#tpu.dimension_semantics<parallel>], iteration_bounds = array<i64: 1>, scalar_prefetch = 0 : i64, scratch_operands = 0 : i64, tpu.core_type = #tpu.core_type<tc>, window_params = [{transform_indices = @transform_0, window_bounds = array<i64: 8, 16>}, {pipeline_mode = #tpu.pipeline_mode<synchronous>, transform_indices = @transform_1, window_bounds = array<i64: 16, 128>}, {pipeline_mode = #tpu.pipeline_mode<synchronous>, transform_indices = @transform_2, window_bounds = array<i64: 1, 128>}, {pipeline_mode = #tpu.pipeline_mode<synchronous>, transform_indices = @transform_3, window_bounds = array<i64: 128, 128>}, {pipeline_mode = #tpu.pipeline_mode<synchronous>, transform_indices = @transform_4, window_bounds = array<i64: 1, 128>}, {pipeline_mode = #tpu.pipeline_mode<synchronous>, transform_indices = @transform_5, window_bounds = array<i64: 128, 128>}, {pipeline_mode = #tpu.pipeline_mode<synchronous>, transform_indices = @transform_6, window_bounds = array<i64: 1, 128>}, {pipeline_mode = #tpu.pipeline_mode<synchronous>, transform_indices = @transform_7, window_bounds = array<i64: 128, 4>}, {pipeline_mode = #tpu.pipeline_mode<synchronous>, transform_indices = @transform_8, window_bounds = array<i64: 1, 4>}, {transform_indices = @transform_9, window_bounds = array<i64: 8, 4>}]} {
    %c0 = arith.constant 0 : index
    %c0_0 = arith.constant 0 : index
    %0 = vector.load %arg1[%c0, %c0_0] : memref<8x16xbf16, #tpu.memory_space<vmem>>, vector<8x16xbf16>
    %c0_1 = arith.constant 0 : index
    %c0_2 = arith.constant 0 : index
    %1 = vector.load %arg2[%c0_1, %c0_2] : memref<16x128xbf16, #tpu.memory_space<vmem>>, vector<16x128xbf16>
    %cst = arith.constant dense<0.000000e+00> : vector<8x128xf32>
    %2 = tpu.matmul %0, %1, %cst {dimension_numbers = #tpu.dot_dimension_numbers<[1], [0], [0], [1], [0, 0, 1, 1], [], []>} : vector<8x16xbf16>, vector<16x128xbf16>, vector<8x128xf32> -> vector<8x128xf32>
    %c0_3 = arith.constant 0 : index
    %c0_4 = arith.constant 0 : index
    %3 = vector.load %arg3[%c0_3, %c0_4] : memref<1x128xf32, #tpu.memory_space<vmem>>, vector<1x128xf32>
    %4 = vector.broadcast %3 : vector<1x128xf32> to vector<8x128xf32>
    %5 = arith.addf %2, %4 : vector<8x128xf32>
    %cst_5 = arith.constant 0.000000e+00 : f32
    %6 = vector.broadcast %cst_5 : f32 to vector<8x128xf32>
    %7 = arith.maximumf %5, %6 : vector<8x128xf32>
    %8 = arith.truncf %7 : vector<8x128xf32> to vector<8x128xbf16>
    %c0_6 = arith.constant 0 : index
    %c0_7 = arith.constant 0 : index
    %9 = vector.load %arg4[%c0_6, %c0_7] : memref<128x128xbf16, #tpu.memory_space<vmem>>, vector<128x128xbf16>
    %cst_8 = arith.constant dense<0.000000e+00> : vector<8x128xf32>
    %10 = tpu.matmul %8, %9, %cst_8 {dimension_numbers = #tpu.dot_dimension_numbers<[1], [0], [0], [1], [0, 0, 1, 1], [], []>} : vector<8x128xbf16>, vector<128x128xbf16>, vector<8x128xf32> -> vector<8x128xf32>
    %c0_9 = arith.constant 0 : index
    %c0_10 = arith.constant 0 : index
    %11 = vector.load %arg5[%c0_9, %c0_10] : memref<1x128xf32, #tpu.memory_space<vmem>>, vector<1x128xf32>
    %12 = vector.broadcast %11 : vector<1x128xf32> to vector<8x128xf32>
    %13 = arith.addf %10, %12 : vector<8x128xf32>
    %cst_11 = arith.constant 0.000000e+00 : f32
    %14 = vector.broadcast %cst_11 : f32 to vector<8x128xf32>
    %15 = arith.maximumf %13, %14 : vector<8x128xf32>
    %16 = arith.truncf %15 : vector<8x128xf32> to vector<8x128xbf16>
    %c0_12 = arith.constant 0 : index
    %c0_13 = arith.constant 0 : index
    %17 = vector.load %arg6[%c0_12, %c0_13] : memref<128x128xbf16, #tpu.memory_space<vmem>>, vector<128x128xbf16>
    %cst_14 = arith.constant dense<0.000000e+00> : vector<8x128xf32>
    %18 = tpu.matmul %16, %17, %cst_14 {dimension_numbers = #tpu.dot_dimension_numbers<[1], [0], [0], [1], [0, 0, 1, 1], [], []>} : vector<8x128xbf16>, vector<128x128xbf16>, vector<8x128xf32> -> vector<8x128xf32>
    %c0_15 = arith.constant 0 : index
    %c0_16 = arith.constant 0 : index
    %19 = vector.load %arg7[%c0_15, %c0_16] : memref<1x128xf32, #tpu.memory_space<vmem>>, vector<1x128xf32>
    %20 = vector.broadcast %19 : vector<1x128xf32> to vector<8x128xf32>
    %21 = arith.addf %18, %20 : vector<8x128xf32>
    %cst_17 = arith.constant 0.000000e+00 : f32
    %22 = vector.broadcast %cst_17 : f32 to vector<8x128xf32>
    %23 = arith.maximumf %21, %22 : vector<8x128xf32>
    %24 = arith.truncf %23 : vector<8x128xf32> to vector<8x128xbf16>
    %c0_18 = arith.constant 0 : index
    %c0_19 = arith.constant 0 : index
    %25 = vector.load %arg8[%c0_18, %c0_19] : memref<128x4xbf16, #tpu.memory_space<vmem>>, vector<128x4xbf16>
    %cst_20 = arith.constant dense<0.000000e+00> : vector<8x4xf32>
    %26 = tpu.matmul %24, %25, %cst_20 {dimension_numbers = #tpu.dot_dimension_numbers<[1], [0], [0], [1], [0, 0, 1, 1], [], []>} : vector<8x128xbf16>, vector<128x4xbf16>, vector<8x4xf32> -> vector<8x4xf32>
    %c0_21 = arith.constant 0 : index
    %c0_22 = arith.constant 0 : index
    %27 = vector.load %arg9[%c0_21, %c0_22] : memref<1x4xf32, #tpu.memory_space<vmem>>, vector<1x4xf32>
    %28 = vector.broadcast %27 : vector<1x4xf32> to vector<8x4xf32>
    %29 = arith.addf %26, %28 : vector<8x4xf32>
    %c0_23 = arith.constant 0 : index
    %c0_24 = arith.constant 0 : index
    %30 = vector.load %arg10[%c0_23, %c0_24] : memref<8x4xf32, #tpu.memory_space<vmem>>, vector<8x4xf32>
    tpu.vector_store %arg10[%c0_23, %c0_24], %29 {strides = array<i32>} : memref<8x4xf32, #tpu.memory_space<vmem>>, vector<8x4xf32>,
    return
  }
  func.func @transform_0(%arg0: i32) -> (i32, i32) {
    %c0_i32 = arith.constant 0 : i32
    %c0_i32_0 = arith.constant 0 : i32
    return %arg0, %c0_i32 : i32, i32
  }
  func.func @transform_1(%arg0: i32) -> (i32, i32) {
    %c0_i32 = arith.constant 0 : i32
    %c0_i32_0 = arith.constant 0 : i32
    %c0_i32_1 = arith.constant 0 : i32
    return %c0_i32, %c0_i32_0 : i32, i32
  }
  func.func @transform_2(%arg0: i32) -> (i32, i32) {
    %c0_i32 = arith.constant 0 : i32
    %c0_i32_0 = arith.constant 0 : i32
    %c0_i32_1 = arith.constant 0 : i32
    return %c0_i32, %c0_i32_0 : i32, i32
  }
  func.func @transform_3(%arg0: i32) -> (i32, i32) {
    %c0_i32 = arith.constant 0 : i32
    %c0_i32_0 = arith.constant 0 : i32
    %c0_i32_1 = arith.constant 0 : i32
    return %c0_i32, %c0_i32_0 : i32, i32
  }
  func.func @transform_4(%arg0: i32) -> (i32, i32) {
    %c0_i32 = arith.constant 0 : i32
    %c0_i32_0 = arith.constant 0 : i32
    %c0_i32_1 = arith.constant 0 : i32
    return %c0_i32, %c0_i32_0 : i32, i32
  }
  func.func @transform_5(%arg0: i32) -> (i32, i32) {
    %c0_i32 = arith.constant 0 : i32
    %c0_i32_0 = arith.constant 0 : i32
    %c0_i32_1 = arith.constant 0 : i32
    return %c0_i32, %c0_i32_0 : i32, i32
  }
  func.func @transform_6(%arg0: i32) -> (i32, i32) {
    %c0_i32 = arith.constant 0 : i32
    %c0_i32_0 = arith.constant 0 : i32
    %c0_i32_1 = arith.constant 0 : i32
    return %c0_i32, %c0_i32_0 : i32, i32
  }
  func.func @transform_7(%arg0: i32) -> (i32, i32) {
    %c0_i32 = arith.constant 0 : i32
    %c0_i32_0 = arith.constant 0 : i32
    %c0_i32_1 = arith.constant 0 : i32
    return %c0_i32, %c0_i32_0 : i32, i32
  }
  func.func @transform_8(%arg0: i32) -> (i32, i32) {
    %c0_i32 = arith.constant 0 : i32
    %c0_i32_0 = arith.constant 0 : i32
    %c0_i32_1 = arith.constant 0 : i32
    return %c0_i32, %c0_i32_0 : i32, i32
  }
  func.func @transform_9(%arg0: i32) -> (i32, i32) {
    %c0_i32 = arith.constant 0 : i32
    %c0_i32_0 = arith.constant 0 : i32
    return %arg0, %c0_i32 : i32, i32
  }
}

module attributes {stable_mosaic.version = 11 : i64} {
  func.func @_mlp_kernel(%arg0: i32, %arg1: memref<8x16xbf16, #tpu.memory_space<vmem>>, %arg2: memref<16x128xbf16, #tpu.memory_space<vmem>>, %arg3: memref<1x128xf32, #tpu.memory_space<vmem>>, %arg4: memref<128x128xbf16, #tpu.memory_space<vmem>>, %arg5: memref<1x128xf32, #tpu.memory_space<vmem>>, %arg6: memref<128x128xbf16, #tpu.memory_space<vmem>>, %arg7: memref<1x128xf32, #tpu.memory_space<vmem>>, %arg8: memref<128x4xbf16, #tpu.memory_space<vmem>>, %arg9: memref<1x4xf32, #tpu.memory_space<vmem>>, %arg10: memref<8x4xf32, #tpu.memory_space<vmem>>) attributes {dimension_semantics = [#tpu.dimension_semantics<parallel>], iteration_bounds = array<i64: 1>, scalar_prefetch = 0 : i64, scratch_operands = 0 : i64, tpu.core_type = #tpu.core_type<tc>, window_params = [{transform_indices = @transform_0, window_bounds = array<i64: 8, 16>}, {pipeline_mode = #tpu.pipeline_mode<synchronous>, transform_indices = @transform_1, window_bounds = array<i64: 16, 128>}, {pipeline_mode = #tpu.pipeline_mode<synchronous>, transform_indices = @transform_2, window_bounds = array<i64: 1, 128>}, {pipeline_mode = #tpu.pipeline_mode<synchronous>, transform_indices = @transform_3, window_bounds = array<i64: 128, 128>}, {pipeline_mode = #tpu.pipeline_mode<synchronous>, transform_indices = @transform_4, window_bounds = array<i64: 1, 128>}, {pipeline_mode = #tpu.pipeline_mode<synchronous>, transform_indices = @transform_5, window_bounds = array<i64: 128, 128>}, {pipeline_mode = #tpu.pipeline_mode<synchronous>, transform_indices = @transform_6, window_bounds = array<i64: 1, 128>}, {pipeline_mode = #tpu.pipeline_mode<synchronous>, transform_indices = @transform_7, window_bounds = array<i64: 128, 4>}, {pipeline_mode = #tpu.pipeline_mode<synchronous>, transform_indices = @transform_8, window_bounds = array<i64: 1, 4>}, {transform_indices = @transform_9, window_bounds = array<i64: 8, 4>}]} {
    %c0 = arith.constant 0 : index
    %c0_0 = arith.constant 0 : index
    %0 = vector.load %arg1[%c0, %c0_0] : memref<8x16xbf16, #tpu.memory_space<vmem>>, vector<8x16xbf16>
    %c0_1 = arith.constant 0 : index
    %c0_2 = arith.constant 0 : index
    %1 = vector.load %arg2[%c0_1, %c0_2] : memref<16x128xbf16, #tpu.memory_space<vmem>>, vector<16x128xbf16>
    %cst = arith.constant dense<0.000000e+00> : vector<8x128xf32>
    %2 = tpu.matmul %0, %1, %cst {dimension_numbers = #tpu.dot_dimension_numbers<[1], [0], [0], [1], [0, 0, 1, 1], [], []>} : vector<8x16xbf16>, vector<16x128xbf16>, vector<8x128xf32> -> vector<8x128xf32>
    %c0_3 = arith.constant 0 : index
    %c0_4 = arith.constant 0 : index
    %3 = vector.load %arg3[%c0_3, %c0_4] : memref<1x128xf32, #tpu.memory_space<vmem>>, vector<1x128xf32>
    %4 = vector.broadcast %3 : vector<1x128xf32> to vector<8x128xf32>
    %5 = arith.addf %2, %4 : vector<8x128xf32>
    %cst_5 = arith.constant 0.000000e+00 : f32
    %6 = vector.broadcast %cst_5 : f32 to vector<8x128xf32>
    %7 = arith.maximumf %5, %6 : vector<8x128xf32>
    %8 = arith.truncf %7 : vector<8x128xf32> to vector<8x128xbf16>
    %c0_6 = arith.constant 0 : index
    %c0_7 = arith.constant 0 : index
    %9 = vector.load %arg4[%c0_6, %c0_7] : memref<128x128xbf16, #tpu.memory_space<vmem>>, vector<128x128xbf16>
    %cst_8 = arith.constant dense<0.000000e+00> : vector<8x128xf32>
    %10 = tpu.matmul %8, %9, %cst_8 {dimension_numbers = #tpu.dot_dimension_numbers<[1], [0], [0], [1], [0, 0, 1, 1], [], []>} : vector<8x128xbf16>, vector<128x128xbf16>, vector<8x128xf32> -> vector<8x128xf32>
    %c0_9 = arith.constant 0 : index
    %c0_10 = arith.constant 0 : index
    %11 = vector.load %arg5[%c0_9, %c0_10] : memref<1x128xf32, #tpu.memory_space<vmem>>, vector<1x128xf32>
    %12 = vector.broadcast %11 : vector<1x128xf32> to vector<8x128xf32>
    %13 = arith.addf %10, %12 : vector<8x128xf32>
    %cst_11 = arith.constant 0.000000e+00 : f32
    %14 = vector.broadcast %cst_11 : f32 to vector<8x128xf32>
    %15 = arith.maximumf %13, %14 : vector<8x128xf32>
    %16 = arith.truncf %15 : vector<8x128xf32> to vector<8x128xbf16>
    %c0_12 = arith.constant 0 : index
    %c0_13 = arith.constant 0 : index
    %17 = vector.load %arg6[%c0_12, %c0_13] : memref<128x128xbf16, #tpu.memory_space<vmem>>, vector<128x128xbf16>
    %cst_14 = arith.constant dense<0.000000e+00> : vector<8x128xf32>
    %18 = tpu.matmul %16, %17, %cst_14 {dimension_numbers = #tpu.dot_dimension_numbers<[1], [0], [0], [1], [0, 0, 1, 1], [], []>} : vector<8x128xbf16>, vector<128x128xbf16>, vector<8x128xf32> -> vector<8x128xf32>
    %c0_15 = arith.constant 0 : index
    %c0_16 = arith.constant 0 : index
    %19 = vector.load %arg7[%c0_15, %c0_16] : memref<1x128xf32, #tpu.memory_space<vmem>>, vector<1x128xf32>
    %20 = vector.broadcast %19 : vector<1x128xf32> to vector<8x128xf32>
    %21 = arith.addf %18, %20 : vector<8x128xf32>
    %cst_17 = arith.constant 0.000000e+00 : f32
    %22 = vector.broadcast %cst_17 : f32 to vector<8x128xf32>
    %23 = arith.maximumf %21, %22 : vector<8x128xf32>
    %24 = arith.truncf %23 : vector<8x128xf32> to vector<8x128xbf16>
    %c0_18 = arith.constant 0 : index
    %c0_19 = arith.constant 0 : index
    %25 = vector.load %arg8[%c0_18, %c0_19] : memref<128x4xbf16, #tpu.memory_space<vmem>>, vector<128x4xbf16>
    %cst_20 = arith.constant dense<0.000000e+00> : vector<8x4xf32>
    %26 = tpu.matmul %24, %25, %cst_20 {dimension_numbers = #tpu.dot_dimension_numbers<[1], [0], [0], [1], [0, 0, 1, 1], [], []>} : vector<8x128xbf16>, vector<128x4xbf16>, vector<8x4xf32> -> vector<8x4xf32>
    %c0_21 = arith.constant 0 : index
    %c0_22 = arith.constant 0 : index
    %27 = vector.load %arg9[%c0_21, %c0_22] : memref<1x4xf32, #tpu.memory_space<vmem>>, vector<1x4xf32>
    %28 = vector.broadcast %27 : vector<1x4xf32> to vector<8x4xf32>
    %29 = arith.addf %26, %28 : vector<8x4xf32>
    %c0_23 = arith.constant 0 : index
    %c0_24 = arith.constant 0 : index
    %30 = vector.load %arg10[%c0_23, %c0_24] : memref<8x4xf32, #tpu.memory_space<vmem>>, vector<8x4xf32>
    tpu.vector_store %arg10[%c0_23, %c0_24], %29 {strides = array<i32>} : memref<8x4xf32, #tpu.memory_space<vmem>>, vector<8x4xf32>,
    return
  }
  func.func @transform_0(%arg0: i32) -> (i32, i32) {
    %c0_i32 = arith.constant 0 : i32
    %c0_i32_0 = arith.constant 0 : i32
    return %arg0, %c0_i32 : i32, i32
  }
  func.func @transform_1(%arg0: i32) -> (i32, i32) {
    %c0_i32 = arith.constant 0 : i32
    %c0_i32_0 = arith.constant 0 : i32
    %c0_i32_1 = arith.constant 0 : i32
    return %c0_i32, %c0_i32_0 : i32, i32
  }
  func.func @transform_2(%arg0: i32) -> (i32, i32) {
    %c0_i32 = arith.constant 0 : i32
    %c0_i32_0 = arith.constant 0 : i32
    %c0_i32_1 = arith.constant 0 : i32
    return %c0_i32, %c0_i32_0 : i32, i32
  }
  func.func @transform_3(%arg0: i32) -> (i32, i32) {
    %c0_i32 = arith.constant 0 : i32
    %c0_i32_0 = arith.constant 0 : i32
    %c0_i32_1 = arith.constant 0 : i32
    return %c0_i32, %c0_i32_0 : i32, i32
  }
  func.func @transform_4(%arg0: i32) -> (i32, i32) {
    %c0_i32 = arith.constant 0 : i32
    %c0_i32_0 = arith.constant 0 : i32
    %c0_i32_1 = arith.constant 0 : i32
    return %c0_i32, %c0_i32_0 : i32, i32
  }
  func.func @transform_5(%arg0: i32) -> (i32, i32) {
    %c0_i32 = arith.constant 0 : i32
    %c0_i32_0 = arith.constant 0 : i32
    %c0_i32_1 = arith.constant 0 : i32
    return %c0_i32, %c0_i32_0 : i32, i32
  }
  func.func @transform_6(%arg0: i32) -> (i32, i32) {
    %c0_i32 = arith.constant 0 : i32
    %c0_i32_0 = arith.constant 0 : i32
    %c0_i32_1 = arith.constant 0 : i32
    return %c0_i32, %c0_i32_0 : i32, i32
  }
  func.func @transform_7(%arg0: i32) -> (i32, i32) {
    %c0_i32 = arith.constant 0 : i32
    %c0_i32_0 = arith.constant 0 : i32
    %c0_i32_1 = arith.constant 0 : i32
    return %c0_i32, %c0_i32_0 : i32, i32
  }
  func.func @transform_8(%arg0: i32) -> (i32, i32) {
    %c0_i32 = arith.constant 0 : i32
    %c0_i32_0 = arith.constant 0 : i32
    %c0_i32_1 = arith.constant 0 : i32
    return %c0_i32, %c0_i32_0 : i32, i32
  }
  func.func @transform_9(%arg0: i32) -> (i32, i32) {
    %c0_i32 = arith.constant 0 : i32
    %c0_i32_0 = arith.constant 0 : i32
    return %arg0, %c0_i32 : i32, i32
  }
}

</mosaic_0001>

<llo_original>
// kernel: tpu_custom_call.1
$region0: #{tpu_custom_call.1}
  #allocation0 [shape = 'u32[]', space=smem, size = 0x4, offset = 0x4, fixed_abs, tag = 'smem constant byte address 0x4 - core index']
  #allocation1 [shape = 'u32[144,128]{1,0:T(1,128)}', space=vmem, size = 0x12000, scoped, tag = 'internal scratch']
  %s0 = inlined_call_operand.vmem [shape: bf16[8,16], index: 0, kind: input, shape index: {}]
  %s1 = inlined_call_operand.vmem [shape: bf16[16,128], index: 1, kind: input, shape index: {}]
  %s2 = inlined_call_operand.vmem [shape: f32[1,128], index: 2, kind: input, shape index: {}]
  %s3 = inlined_call_operand.vmem [shape: bf16[128,128], index: 3, kind: input, shape index: {}]
  %s4 = inlined_call_operand.vmem [shape: f32[1,128], index: 4, kind: input, shape index: {}]
  %s5 = inlined_call_operand.hbm [shape: bf16[128,128], index: 5, kind: input, shape index: {}]
  %s6 = inlined_call_operand.vmem [shape: f32[1,128], index: 6, kind: input, shape index: {}]
  %s7 = inlined_call_operand.vmem [shape: bf16[128,4], index: 7, kind: input, shape index: {}]
  %s8 = inlined_call_operand.vmem [shape: f32[1,4], index: 8, kind: input, shape index: {}]
  %s9 = inlined_call_operand.vmem [shape: f32[8,4], index: 9, kind: output, shape index: {}]
  %s10 = sld [smem:[#allocation0]]
  $region50: #{tpu_custom_call.1} parent=0
    _
  %s12 = ssub.s32 1, %s10
  %s13 = scalar_select 0, %s12, %s10
  $region1: #{tpu_custom_call.1} parent=0
    #allocation2 [shape = 'u8[32768]{0}', space=vmem, size = 0x8000, scoped, tag = 'input window, operand 5, single buffered']
    #allocation3 [shape = 's32[1]{0}', space=sflag, size = 0x4, scoped, tag = 'scoped memory for tpu_custom_call.1']
    %14 = vsyncpa [#allocation3], 0
    // Predicated region
    $region2: #{tpu_custom_call.1} parent=1 // pred_check
      _
    $region3: #{tpu_custom_call.1} parent=1 // pred_check_branch
      %16 = sbr.rel (0) target = $region5
    $region4: #{tpu_custom_call.1} parent=1 // pred_region
      _
    $region5: #{tpu_custom_call.1} parent=1 // pred_fallthru
      _
    // Predicated region
    $region6: #{tpu_custom_call.1} parent=1 // pred_check
      _
    $region7: #{tpu_custom_call.1} parent=1 // pred_check_branch
      %18 = sbr.rel (0) target = $region9
    $region8: #{tpu_custom_call.1} parent=1 // pred_region
      _
    $region9: #{tpu_custom_call.1} parent=1 // pred_fallthru
      _
    // Predicated region
    $region10: #{tpu_custom_call.1} parent=1 // pred_check
      _
    $region11: #{tpu_custom_call.1} parent=1 // pred_check_branch
      %20 = sbr.rel (0) target = $region13
    $region12: #{tpu_custom_call.1} parent=1 // pred_region
      _
    $region13: #{tpu_custom_call.1} parent=1 // pred_fallthru
      _
    // Predicated region
    $region14: #{tpu_custom_call.1} parent=1 // pred_check
      _
    $region15: #{tpu_custom_call.1} parent=1 // pred_check_branch
      %22 = sbr.rel (0) target = $region17
    $region16: #{tpu_custom_call.1} parent=1 // pred_region
      _
    $region17: #{tpu_custom_call.1} parent=1 // pred_fallthru
      _
    // Predicated region
    $region18: #{tpu_custom_call.1} parent=1 // pred_check
      _
    $region19: #{tpu_custom_call.1} parent=1 // pred_check_branch
      %24 = sbr.rel (0) target = $region21
    $region20: #{tpu_custom_call.1} parent=1 // pred_region
      _
    $region21: #{tpu_custom_call.1} parent=1 // pred_fallthru
      _
    // Predicated region
    $region22: #{tpu_custom_call.1} parent=1 // pred_check
      _
    $region23: #{tpu_custom_call.1} parent=1 // pred_check_branch
      %26 = sbr.rel (0) target = $region25
    $region24: #{tpu_custom_call.1} parent=1 // pred_region
      %s28 = ssub.s32 1024, 1024
      %29 = vsyncadd [#allocation3], %s28
      %s30 = sshll.u32 [#allocation2], 4
      %s31 = int_to_ptr.vmem [resolvable:$true] %s30
      %36 = dma.hbm_to_vmem [thread:$0]  %s5, 1024, %s31, [#allocation3], 64, 64, 4
    $region25: #{tpu_custom_call.1} parent=1 // pred_fallthru
      _
    // Predicated region
    $region26: #{tpu_custom_call.1} parent=1 // pred_check
      _
    $region27: #{tpu_custom_call.1} parent=1 // pred_check_branch
      %38 = sbr.rel (0) target = $region29
    $region28: #{tpu_custom_call.1} parent=1 // pred_region
      _
    $region29: #{tpu_custom_call.1} parent=1 // pred_fallthru
      _
    // Predicated region
    $region30: #{tpu_custom_call.1} parent=1 // pred_check
      _
    $region31: #{tpu_custom_call.1} parent=1 // pred_check_branch
      %40 = sbr.rel (0) target = $region33
    $region32: #{tpu_custom_call.1} parent=1 // pred_region
      _
    $region33: #{tpu_custom_call.1} parent=1 // pred_fallthru
      _
    // Predicated region
    $region34: #{tpu_custom_call.1} parent=1 // pred_check
      _
    $region35: #{tpu_custom_call.1} parent=1 // pred_check_branch
      %42 = sbr.rel (0) target = $region37
    $region36: #{tpu_custom_call.1} parent=1 // pred_region
      _
    $region37: #{tpu_custom_call.1} parent=1 // pred_fallthru
      _
    // Predicated region
    $region38: #{tpu_custom_call.1} parent=1 // pred_check
      _
    $region39: #{tpu_custom_call.1} parent=1 // pred_check_branch
      %44 = sbr.rel (0) target = $region41
    $region40: #{tpu_custom_call.1} parent=1 // pred_region
      %45 = dma.done [#allocation3], 1024
    $region41: #{tpu_custom_call.1} parent=1 // pred_fallthru
      _
    %v47 = vld [vmem:[%s0] sm:$0xf]
    %v48 = vld [vmem:[%s1] sm:$0xf]
    %v49 = vld [vmem:[%s1 + $0x4] sm:$0xf]
    %v50 = vld [vmem:[%s2] sm:$0x1]
    %v52 = vlaneseq
    %v53 = vshrl.u32 %v52, 7
    %v54 = vsub.s32 0, %v53
    %v55 = vrot.slane %v50, %v54
    %v59 = vunpack.c.l.b16 %v48
    %v60 = vunpack.c.l.b16 %v49
    %v61 = vpack.c.b16 %v60, %v59
    %vm63 = vcmask 130048
    %v65 = vsel %vm63, %v47, 0
    %67 = vmatprep.subr.bf16.mxu0 0
    %68 = vmatpush1.bf16.msra.mxu0 %v61
    %69 = vmatprep.subr.bf16.mxu0 0
    %70 = vmatpush1.bf16.msra.mxu0 0
    %71 = vmatprep.subr.bf16.mxu0 0
    %72 = vmatpush1.bf16.msra.mxu0 0
    %73 = vmatprep.subr.bf16.mxu0 0
    %74 = vmatpush1.bf16.msra.mxu0 0
    %75 = vmatprep.subr.bf16.mxu0 0
    %76 = vmatpush1.bf16.msra.mxu0 0
    %77 = vmatprep.subr.bf16.mxu0 0
    %78 = vmatpush1.bf16.msra.mxu0 0
    %79 = vmatprep.subr.bf16.mxu0 0
    %80 = vmatpush1.bf16.msra.mxu0 0
    %81 = vmatprep.subr.bf16.mxu0 0
    %82 = vmatpush1.bf16.msra.mxu0 0
    %83 = vmatprep.subr.bf16.mxu0 0
    %84 = vmatpush1.bf16.msra.mxu0 0
    %85 = vmatprep.subr.bf16.mxu0 0
    %86 = vmatpush1.bf16.msra.mxu0 0
    %87 = vmatprep.subr.bf16.mxu0 0
    %88 = vmatpush1.bf16.msra.mxu0 0
    %89 = vmatprep.subr.bf16.mxu0 0
    %90 = vmatpush1.bf16.msra.mxu0 0
    %91 = vmatprep.subr.bf16.mxu0 0
    %92 = vmatpush1.bf16.msra.mxu0 0
    %93 = vmatprep.subr.bf16.mxu0 0
    %94 = vmatpush1.bf16.msra.mxu0 0
    %95 = vmatprep.subr.bf16.mxu0 0
    %96 = vmatpush1.bf16.msra.mxu0 0
    %97 = vmatprep.subr.bf16.mxu0 0
    %98 = vmatpush1.bf16.msra.mxu0 0
    %99 = vmatprep.mubr.bf16.mxu0 0
    %100 = vmatmul.mubr.bf16.gmra.mrb[0].mxu0 %v65
    %v101 = vpop.f32.mrb[0].mxu0
    %v102 = vadd.f32 %v55, %v101
    %v103 = vpop.f32.mrb[0].mxu0
    %v104 = vpop.f32.mrb[0].mxu0
    %v105 = vpop.f32.mrb[0].mxu0
    %106 = vdwg.mxu0
    %v107 = vmax.f32 %v102, 0.0
    %v108 = vpack.c.bf16 %v107, %v107
    %v109 = vld [vmem:[%s3] sm:$0xf]
    %v110 = vld [vmem:[%s3 + $0x4] sm:$0xf]
    %v111 = vld [vmem:[%s3 + $0x8] sm:$0xf]
    %v112 = vld [vmem:[%s3 + $0xc] sm:$0xf]
    %v113 = vld [vmem:[%s3 + $0x10] sm:$0xf]
    %v114 = vld [vmem:[%s3 + $0x14] sm:$0xf]
    %v115 = vld [vmem:[%s3 + $0x18] sm:$0xf]
    %v116 = vld [vmem:[%s3 + $0x1c] sm:$0xf]
    %v117 = vld [vmem:[%s3 + $0x20] sm:$0xf]
    %v118 = vld [vmem:[%s3 + $0x24] sm:$0xf]
    %v119 = vld [vmem:[%s3 + $0x28] sm:$0xf]
    %v120 = vld [vmem:[%s3 + $0x2c] sm:$0xf]
    %v121 = vld [vmem:[%s3 + $0x30] sm:$0xf]
    %v122 = vld [vmem:[%s3 + $0x34] sm:$0xf]
    %v123 = vld [vmem:[%s3 + $0x38] sm:$0xf]
    %v124 = vld [vmem:[%s3 + $0x3c] sm:$0xf]
    %v125 = vld [vmem:[%s4] sm:$0x1]
    %v127 = vlaneseq
    %v128 = vshrl.u32 %v127, 7
    %v129 = vsub.s32 0, %v128
    %v130 = vrot.slane %v125, %v129
    %v148 = vunpack.c.l.b16 %v109
    %v149 = vunpack.c.l.b16 %v110
    %v150 = vunpack.c.l.b16 %v111
    %v151 = vunpack.c.l.b16 %v112
    %v152 = vunpack.c.l.b16 %v113
    %v153 = vunpack.c.l.b16 %v114
    %v154 = vunpack.c.l.b16 %v115
    %v155 = vunpack.c.l.b16 %v116
    %v156 = vunpack.c.l.b16 %v117
    %v157 = vunpack.c.l.b16 %v118
    %v158 = vunpack.c.l.b16 %v119
    %v159 = vunpack.c.l.b16 %v120
    %v160 = vunpack.c.l.b16 %v121
    %v161 = vunpack.c.l.b16 %v122
    %v162 = vunpack.c.l.b16 %v123
    %v163 = vunpack.c.l.b16 %v124
    %v164 = vpack.c.b16 %v149, %v148
    %v165 = vpack.c.b16 %v151, %v150
    %v166 = vpack.c.b16 %v153, %v152
    %v167 = vpack.c.b16 %v155, %v154
    %v168 = vpack.c.b16 %v157, %v156
    %v169 = vpack.c.b16 %v159, %v158
    %v170 = vpack.c.b16 %v161, %v160
    %v171 = vpack.c.b16 %v163, %v162
    %180 = vmatprep.subr.bf16.mxu0 0
    %181 = vmatpush1.bf16.msra.mxu0 %v164
    %182 = vmatprep.subr.bf16.mxu0 0
    %183 = vmatpush1.bf16.msra.mxu0 %v165
    %184 = vmatprep.subr.bf16.mxu0 0
    %185 = vmatpush1.bf16.msra.mxu0 %v166
    %186 = vmatprep.subr.bf16.mxu0 0
    %187 = vmatpush1.bf16.msra.mxu0 %v167
    %188 = vmatprep.subr.bf16.mxu0 0
    %189 = vmatpush1.bf16.msra.mxu0 %v168
    %190 = vmatprep.subr.bf16.mxu0 0
    %191 = vmatpush1.bf16.msra.mxu0 %v169
    %192 = vmatprep.subr.bf16.mxu0 0
    %193 = vmatpush1.bf16.msra.mxu0 %v170
    %194 = vmatprep.subr.bf16.mxu0 0
    %195 = vmatpush1.bf16.msra.mxu0 %v171
    %196 = vmatprep.subr.bf16.mxu0 0
    %197 = vmatpush1.bf16.msra.mxu0 0
    %198 = vmatprep.subr.bf16.mxu0 0
    %199 = vmatpush1.bf16.msra.mxu0 0
    %200 = vmatprep.subr.bf16.mxu0 0
    %201 = vmatpush1.bf16.msra.mxu0 0
    %202 = vmatprep.subr.bf16.mxu0 0
    %203 = vmatpush1.bf16.msra.mxu0 0
    %204 = vmatprep.subr.bf16.mxu0 0
    %205 = vmatpush1.bf16.msra.mxu0 0
    %206 = vmatprep.subr.bf16.mxu0 0
    %207 = vmatpush1.bf16.msra.mxu0 0
    %208 = vmatprep.subr.bf16.mxu0 0
    %209 = vmatpush1.bf16.msra.mxu0 0
    %210 = vmatprep.subr.bf16.mxu0 0
    %211 = vmatpush1.bf16.msra.mxu0 0
    %212 = vmatprep.mubr.bf16.mxu0 0
    %213 = vmatmul.mubr.bf16.gmra.mrb[0].mxu0 %v108
    %v214 = vpop.f32.mrb[0].mxu0
    %v215 = vadd.f32 %v130, %v214
    %v216 = vpop.f32.mrb[0].mxu0
    %v217 = vpop.f32.mrb[0].mxu0
    %v218 = vpop.f32.mrb[0].mxu0
    %219 = vdwg.mxu0
    %v220 = vmax.f32 %v215, 0.0
    %v221 = vpack.c.bf16 %v220, %v220
    %v222 = vld [vmem:[#allocation2] sm:$0xf]
    %v223 = vld [vmem:[#allocation2 + $0x4] sm:$0xf]
    %v224 = vld [vmem:[#allocation2 + $0x8] sm:$0xf]
    %v225 = vld [vmem:[#allocation2 + $0xc] sm:$0xf]
    %v226 = vld [vmem:[#allocation2 + $0x10] sm:$0xf]
    %v227 = vld [vmem:[#allocation2 + $0x14] sm:$0xf]
    %v228 = vld [vmem:[#allocation2 + $0x18] sm:$0xf]
    %v229 = vld [vmem:[#allocation2 + $0x1c] sm:$0xf]
    %v230 = vld [vmem:[#allocation2 + $0x20] sm:$0xf]
    %v231 = vld [vmem:[#allocation2 + $0x24] sm:$0xf]
    %v232 = vld [vmem:[#allocation2 + $0x28] sm:$0xf]
    %v233 = vld [vmem:[#allocation2 + $0x2c] sm:$0xf]
    %v234 = vld [vmem:[#allocation2 + $0x30] sm:$0xf]
    %v235 = vld [vmem:[#allocation2 + $0x34] sm:$0xf]
    %v236 = vld [vmem:[#allocation2 + $0x38] sm:$0xf]
    %v237 = vld [vmem:[#allocation2 + $0x3c] sm:$0xf]
    %v238 = vld [vmem:[%s6] sm:$0x1]
    %v240 = vlaneseq
    %v241 = vshrl.u32 %v240, 7
    %v242 = vsub.s32 0, %v241
    %v243 = vrot.slane %v238, %v242
    %v261 = vunpack.c.l.b16 %v222
    %v262 = vunpack.c.l.b16 %v223
    %v263 = vunpack.c.l.b16 %v224
    %v264 = vunpack.c.l.b16 %v225
    %v265 = vunpack.c.l.b16 %v226
    %v266 = vunpack.c.l.b16 %v227
    %v267 = vunpack.c.l.b16 %v228
    %v268 = vunpack.c.l.b16 %v229
    %v269 = vunpack.c.l.b16 %v230
    %v270 = vunpack.c.l.b16 %v231
    %v271 = vunpack.c.l.b16 %v232
    %v272 = vunpack.c.l.b16 %v233
    %v273 = vunpack.c.l.b16 %v234
    %v274 = vunpack.c.l.b16 %v235
    %v275 = vunpack.c.l.b16 %v236
    %v276 = vunpack.c.l.b16 %v237
    %v277 = vpack.c.b16 %v262, %v261
    %v278 = vpack.c.b16 %v264, %v263
    %v279 = vpack.c.b16 %v266, %v265
    %v280 = vpack.c.b16 %v268, %v267
    %v281 = vpack.c.b16 %v270, %v269
    %v282 = vpack.c.b16 %v272, %v271
    %v283 = vpack.c.b16 %v274, %v273
    %v284 = vpack.c.b16 %v276, %v275
    %293 = vmatprep.subr.bf16.mxu0 0
    %294 = vmatpush1.bf16.msra.mxu0 %v277
    %295 = vmatprep.subr.bf16.mxu0 0
    %296 = vmatpush1.bf16.msra.mxu0 %v278
    %297 = vmatprep.subr.bf16.mxu0 0
    %298 = vmatpush1.bf16.msra.mxu0 %v279
    %299 = vmatprep.subr.bf16.mxu0 0
    %300 = vmatpush1.bf16.msra.mxu0 %v280
    %301 = vmatprep.subr.bf16.mxu0 0
    %302 = vmatpush1.bf16.msra.mxu0 %v281
    %303 = vmatprep.subr.bf16.mxu0 0
    %304 = vmatpush1.bf16.msra.mxu0 %v282
    %305 = vmatprep.subr.bf16.mxu0 0
    %306 = vmatpush1.bf16.msra.mxu0 %v283
    %307 = vmatprep.subr.bf16.mxu0 0
    %308 = vmatpush1.bf16.msra.mxu0 %v284
    %309 = vmatprep.subr.bf16.mxu0 0
    %310 = vmatpush1.bf16.msra.mxu0 0
    %311 = vmatprep.subr.bf16.mxu0 0
    %312 = vmatpush1.bf16.msra.mxu0 0
    %313 = vmatprep.subr.bf16.mxu0 0
    %314 = vmatpush1.bf16.msra.mxu0 0
    %315 = vmatprep.subr.bf16.mxu0 0
    %316 = vmatpush1.bf16.msra.mxu0 0
    %317 = vmatprep.subr.bf16.mxu0 0
    %318 = vmatpush1.bf16.msra.mxu0 0
    %319 = vmatprep.subr.bf16.mxu0 0
    %320 = vmatpush1.bf16.msra.mxu0 0
    %321 = vmatprep.subr.bf16.mxu0 0
    %322 = vmatpush1.bf16.msra.mxu0 0
    %323 = vmatprep.subr.bf16.mxu0 0
    %324 = vmatpush1.bf16.msra.mxu0 0
    %325 = vmatprep.mubr.bf16.mxu0 0
    %326 = vmatmul.mubr.bf16.gmra.mrb[0].mxu0 %v221
    %v327 = vpop.f32.mrb[0].mxu0
    %v328 = vadd.f32 %v243, %v327
    %v329 = vpop.f32.mrb[0].mxu0
    %v330 = vpop.f32.mrb[0].mxu0
    %v331 = vpop.f32.mrb[0].mxu0
    %332 = vdwg.mxu0
    %v333 = vmax.f32 %v328, 0.0
    %v334 = vpack.c.bf16 %v333, %v333
    %v335 = vld [vmem:[%s7] sm:$0xf]
    %v336 = vld [vmem:[%s7 + $0x4] sm:$0xf]
    %v337 = vld [vmem:[%s7 + $0x8] sm:$0xf]
    %v338 = vld [vmem:[%s7 + $0xc] sm:$0xf]
    %v339 = vld [vmem:[%s7 + $0x10] sm:$0xf]
    %v340 = vld [vmem:[%s7 + $0x14] sm:$0xf]
    %v341 = vld [vmem:[%s7 + $0x18] sm:$0xf]
    %v342 = vld [vmem:[%s7 + $0x1c] sm:$0xf]
    %v343 = vld [vmem:[%s7 + $0x20] sm:$0xf]
    %v344 = vld [vmem:[%s7 + $0x24] sm:$0xf]
    %v345 = vld [vmem:[%s7 + $0x28] sm:$0xf]
    %v346 = vld [vmem:[%s7 + $0x2c] sm:$0xf]
    %v347 = vld [vmem:[%s7 + $0x30] sm:$0xf]
    %v348 = vld [vmem:[%s7 + $0x34] sm:$0xf]
    %v349 = vld [vmem:[%s7 + $0x38] sm:$0xf]
    %v350 = vld [vmem:[%s7 + $0x3c] sm:$0xf]
    %v351 = vld [vmem:[%s8] sm:$0x1]
    %v353 = vlaneseq
    %v354 = vshrl.u32 %v353, 7
    %v355 = vsub.s32 0, %v354
    %v356 = vrot.slane %v351, %v355
    %v374 = vunpack.c.l.b16 %v335
    %v375 = vunpack.c.l.b16 %v336
    %v376 = vunpack.c.l.b16 %v337
    %v377 = vunpack.c.l.b16 %v338
    %v378 = vunpack.c.l.b16 %v339
    %v379 = vunpack.c.l.b16 %v340
    %v380 = vunpack.c.l.b16 %v341
    %v381 = vunpack.c.l.b16 %v342
    %v382 = vunpack.c.l.b16 %v343
    %v383 = vunpack.c.l.b16 %v344
    %v384 = vunpack.c.l.b16 %v345
    %v385 = vunpack.c.l.b16 %v346
    %v386 = vunpack.c.l.b16 %v347
    %v387 = vunpack.c.l.b16 %v348
    %v388 = vunpack.c.l.b16 %v349
    %v389 = vunpack.c.l.b16 %v350
    %v390 = vpack.c.b16 %v375, %v374
    %v391 = vpack.c.b16 %v377, %v376
    %v392 = vpack.c.b16 %v379, %v378
    %v393 = vpack.c.b16 %v381, %v380
    %v394 = vpack.c.b16 %v383, %v382
    %v395 = vpack.c.b16 %v385, %v384
    %v396 = vpack.c.b16 %v387, %v386
    %v397 = vpack.c.b16 %v389, %v388
    %406 = vmatprep.subr.bf16.mxu0 0
    %407 = vmatpush1.bf16.msra.mxu0 %v390
    %408 = vmatprep.subr.bf16.mxu0 0
    %409 = vmatpush1.bf16.msra.mxu0 %v391
    %410 = vmatprep.subr.bf16.mxu0 0
    %411 = vmatpush1.bf16.msra.mxu0 %v392
    %412 = vmatprep.subr.bf16.mxu0 0
    %413 = vmatpush1.bf16.msra.mxu0 %v393
    %414 = vmatprep.subr.bf16.mxu0 0
    %415 = vmatpush1.bf16.msra.mxu0 %v394
    %416 = vmatprep.subr.bf16.mxu0 0
    %417 = vmatpush1.bf16.msra.mxu0 %v395
    %418 = vmatprep.subr.bf16.mxu0 0
    %419 = vmatpush1.bf16.msra.mxu0 %v396
    %420 = vmatprep.subr.bf16.mxu0 0
    %421 = vmatpush1.bf16.msra.mxu0 %v397
    %422 = vmatprep.subr.bf16.mxu0 0
    %423 = vmatpush1.bf16.msra.mxu0 0
    %424 = vmatprep.subr.bf16.mxu0 0
    %425 = vmatpush1.bf16.msra.mxu0 0
    %426 = vmatprep.subr.bf16.mxu0 0
    %427 = vmatpush1.bf16.msra.mxu0 0
    %428 = vmatprep.subr.bf16.mxu0 0
    %429 = vmatpush1.bf16.msra.mxu0 0
    %430 = vmatprep.subr.bf16.mxu0 0
    %431 = vmatpush1.bf16.msra.mxu0 0
    %432 = vmatprep.subr.bf16.mxu0 0
    %433 = vmatpush1.bf16.msra.mxu0 0
    %434 = vmatprep.subr.bf16.mxu0 0
    %435 = vmatpush1.bf16.msra.mxu0 0
    %436 = vmatprep.subr.bf16.mxu0 0
    %437 = vmatpush1.bf16.msra.mxu0 0
    %438 = vmatprep.mubr.bf16.mxu0 0
    %439 = vmatmul.mubr.bf16.gmra.mrb[0].mxu0 %v334
    %v440 = vpop.f32.mrb[0].mxu0
    %v441 = vadd.f32 %v356, %v440
    %v442 = vpop.f32.mrb[0].mxu0
    %v443 = vpop.f32.mrb[0].mxu0
    %v444 = vpop.f32.mrb[0].mxu0
    %445 = vdwg.mxu0
    %vm446 = vcmask 31744
    %447 = vst.msk [vmem:[%s9] sm:$0xff] %vm446, %v441
    // Predicated region
    $region42: #{tpu_custom_call.1} parent=1 // pred_check
      _
    $region43: #{tpu_custom_call.1} parent=1 // pred_check_branch
      %449 = sbr.rel (0) target = $region45
    $region44: #{tpu_custom_call.1} parent=1 // pred_region
      _
    $region45: #{tpu_custom_call.1} parent=1 // pred_fallthru
      _
    // Predicated region
    $region46: #{tpu_custom_call.1} parent=1 // pred_check
      _
    $region47: #{tpu_custom_call.1} parent=1 // pred_check_branch
      %451 = sbr.rel (0) target = $region49
    $region48: #{tpu_custom_call.1} parent=1 // pred_region
      _
    $region49: #{tpu_custom_call.1} parent=1 // pred_fallthru
      _
    %452 = vsyncpa [#allocation3], 1

// kernel: tpu_custom_call.1
$region0: #{tpu_custom_call.1}
  #allocation0 [shape = 'u32[]', space=smem, size = 0x4, offset = 0x4, fixed_abs, tag = 'smem constant byte address 0x4 - core index']
  #allocation1 [shape = 'u32[144,128]{1,0:T(1,128)}', space=vmem, size = 0x12000, scoped, tag = 'internal scratch']
  %s0 = inlined_call_operand.vmem [shape: bf16[8,16], index: 0, kind: input, shape index: {}]
  %s1 = inlined_call_operand.vmem [shape: bf16[16,128], index: 1, kind: input, shape index: {}]
  %s2 = inlined_call_operand.vmem [shape: f32[1,128], index: 2, kind: input, shape index: {}]
  %s3 = inlined_call_operand.vmem [shape: bf16[128,128], index: 3, kind: input, shape index: {}]
  %s4 = inlined_call_operand.vmem [shape: f32[1,128], index: 4, kind: input, shape index: {}]
  %s5 = inlined_call_operand.hbm [shape: bf16[128,128], index: 5, kind: input, shape index: {}]
  %s6 = inlined_call_operand.vmem [shape: f32[1,128], index: 6, kind: input, shape index: {}]
  %s7 = inlined_call_operand.vmem [shape: bf16[128,4], index: 7, kind: input, shape index: {}]
  %s8 = inlined_call_operand.vmem [shape: f32[1,4], index: 8, kind: input, shape index: {}]
  %s9 = inlined_call_operand.vmem [shape: f32[8,4], index: 9, kind: output, shape index: {}]
  %s10 = sld [smem:[#allocation0]]
  $region50: #{tpu_custom_call.1} parent=0
    _
  %s12 = ssub.s32 1, %s10
  %s13 = scalar_select 0, %s12, %s10
  $region1: #{tpu_custom_call.1} parent=0
    #allocation2 [shape = 'u8[32768]{0}', space=vmem, size = 0x8000, scoped, tag = 'input window, operand 5, single buffered']
    #allocation3 [shape = 's32[1]{0}', space=sflag, size = 0x4, scoped, tag = 'scoped memory for tpu_custom_call.1']
    %14 = vsyncpa [#allocation3], 0
    // Predicated region
    $region2: #{tpu_custom_call.1} parent=1 // pred_check
      _
    $region3: #{tpu_custom_call.1} parent=1 // pred_check_branch
      %16 = sbr.rel (0) target = $region5
    $region4: #{tpu_custom_call.1} parent=1 // pred_region
      _
    $region5: #{tpu_custom_call.1} parent=1 // pred_fallthru
      _
    // Predicated region
    $region6: #{tpu_custom_call.1} parent=1 // pred_check
      _
    $region7: #{tpu_custom_call.1} parent=1 // pred_check_branch
      %18 = sbr.rel (0) target = $region9
    $region8: #{tpu_custom_call.1} parent=1 // pred_region
      _
    $region9: #{tpu_custom_call.1} parent=1 // pred_fallthru
      _
    // Predicated region
    $region10: #{tpu_custom_call.1} parent=1 // pred_check
      _
    $region11: #{tpu_custom_call.1} parent=1 // pred_check_branch
      %20 = sbr.rel (0) target = $region13
    $region12: #{tpu_custom_call.1} parent=1 // pred_region
      _
    $region13: #{tpu_custom_call.1} parent=1 // pred_fallthru
      _
    // Predicated region
    $region14: #{tpu_custom_call.1} parent=1 // pred_check
      _
    $region15: #{tpu_custom_call.1} parent=1 // pred_check_branch
      %22 = sbr.rel (0) target = $region17
    $region16: #{tpu_custom_call.1} parent=1 // pred_region
      _
    $region17: #{tpu_custom_call.1} parent=1 // pred_fallthru
      _
    // Predicated region
    $region18: #{tpu_custom_call.1} parent=1 // pred_check
      _
    $region19: #{tpu_custom_call.1} parent=1 // pred_check_branch
      %24 = sbr.rel (0) target = $region21
    $region20: #{tpu_custom_call.1} parent=1 // pred_region
      _
    $region21: #{tpu_custom_call.1} parent=1 // pred_fallthru
      _
    // Predicated region
    $region22: #{tpu_custom_call.1} parent=1 // pred_check
      _
    $region23: #{tpu_custom_call.1} parent=1 // pred_check_branch
      %26 = sbr.rel (0) target = $region25
    $region24: #{tpu_custom_call.1} parent=1 // pred_region
      %s28 = ssub.s32 1024, 1024
      %29 = vsyncadd [#allocation3], %s28
      %s30 = sshll.u32 [#allocation2], 4
      %s31 = int_to_ptr.vmem [resolvable:$true] %s30
      %36 = dma.hbm_to_vmem [thread:$0]  %s5, 1024, %s31, [#allocation3], 64, 64, 4
    $region25: #{tpu_custom_call.1} parent=1 // pred_fallthru
      _
    // Predicated region
    $region26: #{tpu_custom_call.1} parent=1 // pred_check
      _
    $region27: #{tpu_custom_call.1} parent=1 // pred_check_branch
      %38 = sbr.rel (0) target = $region29
    $region28: #{tpu_custom_call.1} parent=1 // pred_region
      _
    $region29: #{tpu_custom_call.1} parent=1 // pred_fallthru
      _
    // Predicated region
    $region30: #{tpu_custom_call.1} parent=1 // pred_check
      _
    $region31: #{tpu_custom_call.1} parent=1 // pred_check_branch
      %40 = sbr.rel (0) target = $region33
    $region32: #{tpu_custom_call.1} parent=1 // pred_region
      _
    $region33: #{tpu_custom_call.1} parent=1 // pred_fallthru
      _
    // Predicated region
    $region34: #{tpu_custom_call.1} parent=1 // pred_check
      _
    $region35: #{tpu_custom_call.1} parent=1 // pred_check_branch
      %42 = sbr.rel (0) target = $region37
    $region36: #{tpu_custom_call.1} parent=1 // pred_region
      _
    $region37: #{tpu_custom_call.1} parent=1 // pred_fallthru
      _
    // Predicated region
    $region38: #{tpu_custom_call.1} parent=1 // pred_check
      _
    $region39: #{tpu_custom_call.1} parent=1 // pred_check_branch
      %44 = sbr.rel (0) target = $region41
    $region40: #{tpu_custom_call.1} parent=1 // pred_region
      %45 = dma.done [#allocation3], 1024
    $region41: #{tpu_custom_call.1} parent=1 // pred_fallthru
      _
    %v47 = vld [vmem:[%s0] sm:$0xf]
    %v48 = vld [vmem:[%s1] sm:$0xf]
    %v49 = vld [vmem:[%s1 + $0x4] sm:$0xf]
    %v50 = vld [vmem:[%s2] sm:$0x1]
    %v52 = vlaneseq
    %v53 = vshrl.u32 %v52, 7
    %v54 = vsub.s32 0, %v53
    %v55 = vrot.slane %v50, %v54
    %v59 = vunpack.c.l.b16 %v48
    %v60 = vunpack.c.l.b16 %v49
    %v61 = vpack.c.b16 %v60, %v59
    %vm63 = vcmask 130048
    %v65 = vsel %vm63, %v47, 0
    %67 = vmatprep.subr.bf16.mxu0 0
    %68 = vmatpush1.bf16.msra.mxu0 %v61
    %69 = vmatprep.subr.bf16.mxu0 0
    %70 = vmatpush1.bf16.msra.mxu0 0
    %71 = vmatprep.subr.bf16.mxu0 0
    %72 = vmatpush1.bf16.msra.mxu0 0
    %73 = vmatprep.subr.bf16.mxu0 0
    %74 = vmatpush1.bf16.msra.mxu0 0
    %75 = vmatprep.subr.bf16.mxu0 0
    %76 = vmatpush1.bf16.msra.mxu0 0
    %77 = vmatprep.subr.bf16.mxu0 0
    %78 = vmatpush1.bf16.msra.mxu0 0
    %79 = vmatprep.subr.bf16.mxu0 0
    %80 = vmatpush1.bf16.msra.mxu0 0
    %81 = vmatprep.subr.bf16.mxu0 0
    %82 = vmatpush1.bf16.msra.mxu0 0
    %83 = vmatprep.subr.bf16.mxu0 0
    %84 = vmatpush1.bf16.msra.mxu0 0
    %85 = vmatprep.subr.bf16.mxu0 0
    %86 = vmatpush1.bf16.msra.mxu0 0
    %87 = vmatprep.subr.bf16.mxu0 0
    %88 = vmatpush1.bf16.msra.mxu0 0
    %89 = vmatprep.subr.bf16.mxu0 0
    %90 = vmatpush1.bf16.msra.mxu0 0
    %91 = vmatprep.subr.bf16.mxu0 0
    %92 = vmatpush1.bf16.msra.mxu0 0
    %93 = vmatprep.subr.bf16.mxu0 0
    %94 = vmatpush1.bf16.msra.mxu0 0
    %95 = vmatprep.subr.bf16.mxu0 0
    %96 = vmatpush1.bf16.msra.mxu0 0
    %97 = vmatprep.subr.bf16.mxu0 0
    %98 = vmatpush1.bf16.msra.mxu0 0
    %99 = vmatprep.mubr.bf16.mxu0 0
    %100 = vmatmul.mubr.bf16.gmra.mrb[0].mxu0 %v65
    %v101 = vpop.f32.mrb[0].mxu0
    %v102 = vadd.f32 %v55, %v101
    %v103 = vpop.f32.mrb[0].mxu0
    %v104 = vpop.f32.mrb[0].mxu0
    %v105 = vpop.f32.mrb[0].mxu0
    %106 = vdwg.mxu0
    %v107 = vmax.f32 %v102, 0.0
    %v108 = vpack.c.bf16 %v107, %v107
    %v109 = vld [vmem:[%s3] sm:$0xf]
    %v110 = vld [vmem:[%s3 + $0x4] sm:$0xf]
    %v111 = vld [vmem:[%s3 + $0x8] sm:$0xf]
    %v112 = vld [vmem:[%s3 + $0xc] sm:$0xf]
    %v113 = vld [vmem:[%s3 + $0x10] sm:$0xf]
    %v114 = vld [vmem:[%s3 + $0x14] sm:$0xf]
    %v115 = vld [vmem:[%s3 + $0x18] sm:$0xf]
    %v116 = vld [vmem:[%s3 + $0x1c] sm:$0xf]
    %v117 = vld [vmem:[%s3 + $0x20] sm:$0xf]
    %v118 = vld [vmem:[%s3 + $0x24] sm:$0xf]
    %v119 = vld [vmem:[%s3 + $0x28] sm:$0xf]
    %v120 = vld [vmem:[%s3 + $0x2c] sm:$0xf]
    %v121 = vld [vmem:[%s3 + $0x30] sm:$0xf]
    %v122 = vld [vmem:[%s3 + $0x34] sm:$0xf]
    %v123 = vld [vmem:[%s3 + $0x38] sm:$0xf]
    %v124 = vld [vmem:[%s3 + $0x3c] sm:$0xf]
    %v125 = vld [vmem:[%s4] sm:$0x1]
    %v127 = vlaneseq
    %v128 = vshrl.u32 %v127, 7
    %v129 = vsub.s32 0, %v128
    %v130 = vrot.slane %v125, %v129
    %v148 = vunpack.c.l.b16 %v109
    %v149 = vunpack.c.l.b16 %v110
    %v150 = vunpack.c.l.b16 %v111
    %v151 = vunpack.c.l.b16 %v112
    %v152 = vunpack.c.l.b16 %v113
    %v153 = vunpack.c.l.b16 %v114
    %v154 = vunpack.c.l.b16 %v115
    %v155 = vunpack.c.l.b16 %v116
    %v156 = vunpack.c.l.b16 %v117
    %v157 = vunpack.c.l.b16 %v118
    %v158 = vunpack.c.l.b16 %v119
    %v159 = vunpack.c.l.b16 %v120
    %v160 = vunpack.c.l.b16 %v121
    %v161 = vunpack.c.l.b16 %v122
    %v162 = vunpack.c.l.b16 %v123
    %v163 = vunpack.c.l.b16 %v124
    %v164 = vpack.c.b16 %v149, %v148
    %v165 = vpack.c.b16 %v151, %v150
    %v166 = vpack.c.b16 %v153, %v152
    %v167 = vpack.c.b16 %v155, %v154
    %v168 = vpack.c.b16 %v157, %v156
    %v169 = vpack.c.b16 %v159, %v158
    %v170 = vpack.c.b16 %v161, %v160
    %v171 = vpack.c.b16 %v163, %v162
    %180 = vmatprep.subr.bf16.mxu0 0
    %181 = vmatpush1.bf16.msra.mxu0 %v164
    %182 = vmatprep.subr.bf16.mxu0 0
    %183 = vmatpush1.bf16.msra.mxu0 %v165
    %184 = vmatprep.subr.bf16.mxu0 0
    %185 = vmatpush1.bf16.msra.mxu0 %v166
    %186 = vmatprep.subr.bf16.mxu0 0
    %187 = vmatpush1.bf16.msra.mxu0 %v167
    %188 = vmatprep.subr.bf16.mxu0 0
    %189 = vmatpush1.bf16.msra.mxu0 %v168
    %190 = vmatprep.subr.bf16.mxu0 0
    %191 = vmatpush1.bf16.msra.mxu0 %v169
    %192 = vmatprep.subr.bf16.mxu0 0
    %193 = vmatpush1.bf16.msra.mxu0 %v170
    %194 = vmatprep.subr.bf16.mxu0 0
    %195 = vmatpush1.bf16.msra.mxu0 %v171
    %196 = vmatprep.subr.bf16.mxu0 0
    %197 = vmatpush1.bf16.msra.mxu0 0
    %198 = vmatprep.subr.bf16.mxu0 0
    %199 = vmatpush1.bf16.msra.mxu0 0
    %200 = vmatprep.subr.bf16.mxu0 0
    %201 = vmatpush1.bf16.msra.mxu0 0
    %202 = vmatprep.subr.bf16.mxu0 0
    %203 = vmatpush1.bf16.msra.mxu0 0
    %204 = vmatprep.subr.bf16.mxu0 0
    %205 = vmatpush1.bf16.msra.mxu0 0
    %206 = vmatprep.subr.bf16.mxu0 0
    %207 = vmatpush1.bf16.msra.mxu0 0
    %208 = vmatprep.subr.bf16.mxu0 0
    %209 = vmatpush1.bf16.msra.mxu0 0
    %210 = vmatprep.subr.bf16.mxu0 0
    %211 = vmatpush1.bf16.msra.mxu0 0
    %212 = vmatprep.mubr.bf16.mxu0 0
    %213 = vmatmul.mubr.bf16.gmra.mrb[0].mxu0 %v108
    %v214 = vpop.f32.mrb[0].mxu0
    %v215 = vadd.f32 %v130, %v214
    %v216 = vpop.f32.mrb[0].mxu0
    %v217 = vpop.f32.mrb[0].mxu0
    %v218 = vpop.f32.mrb[0].mxu0
    %219 = vdwg.mxu0
    %v220 = vmax.f32 %v215, 0.0
    %v221 = vpack.c.bf16 %v220, %v220
    %v222 = vld [vmem:[#allocation2] sm:$0xf]
    %v223 = vld [vmem:[#allocation2 + $0x4] sm:$0xf]
    %v224 = vld [vmem:[#allocation2 + $0x8] sm:$0xf]
    %v225 = vld [vmem:[#allocation2 + $0xc] sm:$0xf]
    %v226 = vld [vmem:[#allocation2 + $0x10] sm:$0xf]
    %v227 = vld [vmem:[#allocation2 + $0x14] sm:$0xf]
    %v228 = vld [vmem:[#allocation2 + $0x18] sm:$0xf]
    %v229 = vld [vmem:[#allocation2 + $0x1c] sm:$0xf]
    %v230 = vld [vmem:[#allocation2 + $0x20] sm:$0xf]
    %v231 = vld [vmem:[#allocation2 + $0x24] sm:$0xf]
    %v232 = vld [vmem:[#allocation2 + $0x28] sm:$0xf]
    %v233 = vld [vmem:[#allocation2 + $0x2c] sm:$0xf]
    %v234 = vld [vmem:[#allocation2 + $0x30] sm:$0xf]
    %v235 = vld [vmem:[#allocation2 + $0x34] sm:$0xf]
    %v236 = vld [vmem:[#allocation2 + $0x38] sm:$0xf]
    %v237 = vld [vmem:[#allocation2 + $0x3c] sm:$0xf]
    %v238 = vld [vmem:[%s6] sm:$0x1]
    %v240 = vlaneseq
    %v241 = vshrl.u32 %v240, 7
    %v242 = vsub.s32 0, %v241
    %v243 = vrot.slane %v238, %v242
    %v261 = vunpack.c.l.b16 %v222
    %v262 = vunpack.c.l.b16 %v223
    %v263 = vunpack.c.l.b16 %v224
    %v264 = vunpack.c.l.b16 %v225
    %v265 = vunpack.c.l.b16 %v226
    %v266 = vunpack.c.l.b16 %v227
    %v267 = vunpack.c.l.b16 %v228
    %v268 = vunpack.c.l.b16 %v229
    %v269 = vunpack.c.l.b16 %v230
    %v270 = vunpack.c.l.b16 %v231
    %v271 = vunpack.c.l.b16 %v232
    %v272 = vunpack.c.l.b16 %v233
    %v273 = vunpack.c.l.b16 %v234
    %v274 = vunpack.c.l.b16 %v235
    %v275 = vunpack.c.l.b16 %v236
    %v276 = vunpack.c.l.b16 %v237
    %v277 = vpack.c.b16 %v262, %v261
    %v278 = vpack.c.b16 %v264, %v263
    %v279 = vpack.c.b16 %v266, %v265
    %v280 = vpack.c.b16 %v268, %v267
    %v281 = vpack.c.b16 %v270, %v269
    %v282 = vpack.c.b16 %v272, %v271
    %v283 = vpack.c.b16 %v274, %v273
    %v284 = vpack.c.b16 %v276, %v275
    %293 = vmatprep.subr.bf16.mxu0 0
    %294 = vmatpush1.bf16.msra.mxu0 %v277
    %295 = vmatprep.subr.bf16.mxu0 0
    %296 = vmatpush1.bf16.msra.mxu0 %v278
    %297 = vmatprep.subr.bf16.mxu0 0
    %298 = vmatpush1.bf16.msra.mxu0 %v279
    %299 = vmatprep.subr.bf16.mxu0 0
    %300 = vmatpush1.bf16.msra.mxu0 %v280
    %301 = vmatprep.subr.bf16.mxu0 0
    %302 = vmatpush1.bf16.msra.mxu0 %v281
    %303 = vmatprep.subr.bf16.mxu0 0
    %304 = vmatpush1.bf16.msra.mxu0 %v282
    %305 = vmatprep.subr.bf16.mxu0 0
    %306 = vmatpush1.bf16.msra.mxu0 %v283
    %307 = vmatprep.subr.bf16.mxu0 0
    %308 = vmatpush1.bf16.msra.mxu0 %v284
    %309 = vmatprep.subr.bf16.mxu0 0
    %310 = vmatpush1.bf16.msra.mxu0 0
    %311 = vmatprep.subr.bf16.mxu0 0
    %312 = vmatpush1.bf16.msra.mxu0 0
    %313 = vmatprep.subr.bf16.mxu0 0
    %314 = vmatpush1.bf16.msra.mxu0 0
    %315 = vmatprep.subr.bf16.mxu0 0
    %316 = vmatpush1.bf16.msra.mxu0 0
    %317 = vmatprep.subr.bf16.mxu0 0
    %318 = vmatpush1.bf16.msra.mxu0 0
    %319 = vmatprep.subr.bf16.mxu0 0
    %320 = vmatpush1.bf16.msra.mxu0 0
    %321 = vmatprep.subr.bf16.mxu0 0
    %322 = vmatpush1.bf16.msra.mxu0 0
    %323 = vmatprep.subr.bf16.mxu0 0
    %324 = vmatpush1.bf16.msra.mxu0 0
    %325 = vmatprep.mubr.bf16.mxu0 0
    %326 = vmatmul.mubr.bf16.gmra.mrb[0].mxu0 %v221
    %v327 = vpop.f32.mrb[0].mxu0
    %v328 = vadd.f32 %v243, %v327
    %v329 = vpop.f32.mrb[0].mxu0
    %v330 = vpop.f32.mrb[0].mxu0
    %v331 = vpop.f32.mrb[0].mxu0
    %332 = vdwg.mxu0
    %v333 = vmax.f32 %v328, 0.0
    %v334 = vpack.c.bf16 %v333, %v333
    %v335 = vld [vmem:[%s7] sm:$0xf]
    %v336 = vld [vmem:[%s7 + $0x4] sm:$0xf]
    %v337 = vld [vmem:[%s7 + $0x8] sm:$0xf]
    %v338 = vld [vmem:[%s7 + $0xc] sm:$0xf]
    %v339 = vld [vmem:[%s7 + $0x10] sm:$0xf]
    %v340 = vld [vmem:[%s7 + $0x14] sm:$0xf]
    %v341 = vld [vmem:[%s7 + $0x18] sm:$0xf]
    %v342 = vld [vmem:[%s7 + $0x1c] sm:$0xf]
    %v343 = vld [vmem:[%s7 + $0x20] sm:$0xf]
    %v344 = vld [vmem:[%s7 + $0x24] sm:$0xf]
    %v345 = vld [vmem:[%s7 + $0x28] sm:$0xf]
    %v346 = vld [vmem:[%s7 + $0x2c] sm:$0xf]
    %v347 = vld [vmem:[%s7 + $0x30] sm:$0xf]
    %v348 = vld [vmem:[%s7 + $0x34] sm:$0xf]
    %v349 = vld [vmem:[%s7 + $0x38] sm:$0xf]
    %v350 = vld [vmem:[%s7 + $0x3c] sm:$0xf]
    %v351 = vld [vmem:[%s8] sm:$0x1]
    %v353 = vlaneseq
    %v354 = vshrl.u32 %v353, 7
    %v355 = vsub.s32 0, %v354
    %v356 = vrot.slane %v351, %v355
    %v374 = vunpack.c.l.b16 %v335
    %v375 = vunpack.c.l.b16 %v336
    %v376 = vunpack.c.l.b16 %v337
    %v377 = vunpack.c.l.b16 %v338
    %v378 = vunpack.c.l.b16 %v339
    %v379 = vunpack.c.l.b16 %v340
    %v380 = vunpack.c.l.b16 %v341
    %v381 = vunpack.c.l.b16 %v342
    %v382 = vunpack.c.l.b16 %v343
    %v383 = vunpack.c.l.b16 %v344
    %v384 = vunpack.c.l.b16 %v345
    %v385 = vunpack.c.l.b16 %v346
    %v386 = vunpack.c.l.b16 %v347
    %v387 = vunpack.c.l.b16 %v348
    %v388 = vunpack.c.l.b16 %v349
    %v389 = vunpack.c.l.b16 %v350
    %v390 = vpack.c.b16 %v375, %v374
    %v391 = vpack.c.b16 %v377, %v376
    %v392 = vpack.c.b16 %v379, %v378
    %v393 = vpack.c.b16 %v381, %v380
    %v394 = vpack.c.b16 %v383, %v382
    %v395 = vpack.c.b16 %v385, %v384
    %v396 = vpack.c.b16 %v387, %v386
    %v397 = vpack.c.b16 %v389, %v388
    %406 = vmatprep.subr.bf16.mxu0 0
    %407 = vmatpush1.bf16.msra.mxu0 %v390
    %408 = vmatprep.subr.bf16.mxu0 0
    %409 = vmatpush1.bf16.msra.mxu0 %v391
    %410 = vmatprep.subr.bf16.mxu0 0
    %411 = vmatpush1.bf16.msra.mxu0 %v392
    %412 = vmatprep.subr.bf16.mxu0 0
    %413 = vmatpush1.bf16.msra.mxu0 %v393
    %414 = vmatprep.subr.bf16.mxu0 0
    %415 = vmatpush1.bf16.msra.mxu0 %v394
    %416 = vmatprep.subr.bf16.mxu0 0
    %417 = vmatpush1.bf16.msra.mxu0 %v395
    %418 = vmatprep.subr.bf16.mxu0 0
    %419 = vmatpush1.bf16.msra.mxu0 %v396
    %420 = vmatprep.subr.bf16.mxu0 0
    %421 = vmatpush1.bf16.msra.mxu0 %v397
    %422 = vmatprep.subr.bf16.mxu0 0
    %423 = vmatpush1.bf16.msra.mxu0 0
    %424 = vmatprep.subr.bf16.mxu0 0
    %425 = vmatpush1.bf16.msra.mxu0 0
    %426 = vmatprep.subr.bf16.mxu0 0
    %427 = vmatpush1.bf16.msra.mxu0 0
    %428 = vmatprep.subr.bf16.mxu0 0
    %429 = vmatpush1.bf16.msra.mxu0 0
    %430 = vmatprep.subr.bf16.mxu0 0
    %431 = vmatpush1.bf16.msra.mxu0 0
    %432 = vmatprep.subr.bf16.mxu0 0
    %433 = vmatpush1.bf16.msra.mxu0 0
    %434 = vmatprep.subr.bf16.mxu0 0
    %435 = vmatpush1.bf16.msra.mxu0 0
    %436 = vmatprep.subr.bf16.mxu0 0
    %437 = vmatpush1.bf16.msra.mxu0 0
    %438 = vmatprep.mubr.bf16.mxu0 0
    %439 = vmatmul.mubr.bf16.gmra.mrb[0].mxu0 %v334
    %v440 = vpop.f32.mrb[0].mxu0
    %v441 = vadd.f32 %v356, %v440
    %v442 = vpop.f32.mrb[0].mxu0
    %v443 = vpop.f32.mrb[0].mxu0
    %v444 = vpop.f32.mrb[0].mxu0
    %445 = vdwg.mxu0
    %vm446 = vcmask 31744
    %447 = vst.msk [vmem:[%s9] sm:$0xff] %vm446, %v441
    // Predicated region
    $region42: #{tpu_custom_call.1} parent=1 // pred_check
      _
    $region43: #{tpu_custom_call.1} parent=1 // pred_check_branch
      %449 = sbr.rel (0) target = $region45
    $region44: #{tpu_custom_call.1} parent=1 // pred_region
      _
    $region45: #{tpu_custom_call.1} parent=1 // pred_fallthru
      _
    // Predicated region
    $region46: #{tpu_custom_call.1} parent=1 // pred_check
      _
    $region47: #{tpu_custom_call.1} parent=1 // pred_check_branch
      %451 = sbr.rel (0) target = $region49
    $region48: #{tpu_custom_call.1} parent=1 // pred_region
      _
    $region49: #{tpu_custom_call.1} parent=1 // pred_fallthru
      _
    %452 = vsyncpa [#allocation3], 1

</llo_original>
